<compile_context>
chip_gen: v5e
topology: v5e:2x2
jax: 0.10.0
libtpu: 0.0.40
codegen_flags: <defaults>
</compile_context>

<pallas_src>
import math

import numpy as np
import jax
import jax.numpy as jnp
from jax.experimental import pallas as pl
from jax.experimental.pallas import tpu as pltpu


def _gaussian_1d(window_size: int, sigma: float) -> np.ndarray:
    """Matches the PyTorch `gaussian()` helper (normalized 1D gaussian)."""
    g = np.array(
        [math.exp(-(x - window_size // 2) ** 2 / float(2 * sigma ** 2))
         for x in range(window_size)],
        dtype=np.float64,
    )
    g = g / g.sum()
    return g.astype(np.float32)


def _gv_matrix(H: int, ws: int, g: np.ndarray) -> np.ndarray:
    """Banded (Hout, H) matrix for the vertical 'valid' Gaussian pass."""
    Hout = H - ws + 1
    Gv = np.zeros((Hout, H), np.float32)
    for t in range(ws):
        Gv[np.arange(Hout), np.arange(Hout) + t] = g[t]
    return Gv


def _vmem_capacity_bytes() -> int:
    """Generation-aware VMEM capacity (falls back to the smallest, v7x-sized)."""
    try:
        cap = int(pltpu.get_tpu_info().vmem_capacity_bytes)
        if cap > 0:
            return cap
    except Exception:
        pass
    return 64 * 1024 * 1024


def _choose_planes_per_step(N: int, H: int, W: int, Hout: int,
                            in_bytes: int, budget: int) -> int:
    """Pick P (planes per grid step): P*W must be a multiple of 128, the VMEM
    estimate must fit the (generation-aware) budget, and when the plane count
    allows it we keep >= 2 grid steps for megacore sharding / pipelining."""
    step = 128 // math.gcd(W, 128)          # smallest P with P*W % 128 == 0
    n_cap = -(-N // step) * step            # smallest multiple of step >= N

    def vmem_bytes(p):
        pw = p * W
        b = 0
        b += 2 * 2 * H * pw * in_bytes      # double-buffered x1, x2 blocks
        b += H * 5 * pw * (4 + 2 + 2)       # fused field slab f32 + hi/lo bf16
        b += 3 * Hout * 5 * pw * 4          # vertical-pass result + partials
        b += 2 * Hout * 5 * pw * 4          # tap-accumulation temporaries
        b += 6 * Hout * pw * 4              # per-field maps / elementwise temps
        b += 2 * 8 * pw * 4                 # double-buffered output block
        b += 2 * Hout * H * 4               # Gv
        return b

    # Prefer >= 2 grid steps (2 TCs on v7x + input double-buffering) when the
    # number of planes makes that possible without breaking lane alignment.
    p_cap = n_cap
    if n_cap >= 2 * step:
        p_cap = max(step, (n_cap // 2) // step * step)

    P = step
    while P + step <= p_cap and vmem_bytes(P + step) <= budget:
        P += step
    # TODO(synk): if vmem_bytes(step) > budget (huge H*W planes), halo
    # row-tiling over H is required; not implemented here.
    return P


def _make_ssim_kernel(C1: float, C2: float, g: np.ndarray,
                      ws: int, W: int, Wout: int, P: int):
    PW = P * W
    taps = [float(t) for t in g]

    def kernel(x1_ref, x2_ref, gv_ref, out_ref):
        x1 = x1_ref[...].astype(jnp.float32)      # (H, P*W)
        x2 = x2_ref[...].astype(jnp.float32)      # (H, P*W)
        gv = gv_ref[...]                          # (Hout, H) f32
        Hout = gv.shape[0]

        # ---- fused field slab: [x1, x2, x1^2, x2^2, x1*x2] along lanes ----
        f = jnp.concatenate([x1, x2, x1 * x1, x2 * x2, x1 * x2], axis=1)

        # ---- pass 1: vertical Gaussian, ONE fused MXU matmul.
        # 3-pass bf16 hi/lo split (~Precision.HIGH) with f32 accumulation:
        # ~2x fewer MXU passes than HIGHEST while keeping enough precision
        # for the E[x^2] - mu^2 cancellation downstream.
        gv_hi = gv.astype(jnp.bfloat16)
        gv_lo = (gv - gv_hi.astype(jnp.float32)).astype(jnp.bfloat16)
        f_hi = f.astype(jnp.bfloat16)
        f_lo = (f - f_hi.astype(jnp.float32)).astype(jnp.bfloat16)
        v = (jnp.dot(gv_hi, f_hi, preferred_element_type=jnp.float32)
             + jnp.dot(gv_hi, f_lo, preferred_element_type=jnp.float32)
             + jnp.dot(gv_lo, f_hi, preferred_element_type=jnp.float32))
        # v: (Hout, 5*P*W)

        # ---- pass 2: horizontal Gaussian as a banded tap accumulation ----
        # acc[:, l] = sum_j g[j] * v[:, l + j]; valid output columns are
        # (lane % W) < Wout inside each plane block (other lanes mix adjacent
        # planes and are masked out before the reduction).  No block-diagonal
        # matmul, no wasted MXU FLOPs, no P^2 VMEM operand.
        L = 5 * PW
        Lp = L - (ws - 1)
        acc = taps[0] * v[:, 0:Lp]
        for j in range(1, ws):
            acc = acc + taps[j] * v[:, j:j + Lp]
        res = acc if ws == 1 else jnp.pad(acc, ((0, 0), (0, ws - 1)))

        mu1 = res[:, 0 * PW:1 * PW]
        mu2 = res[:, 1 * PW:2 * PW]
        e11 = res[:, 2 * PW:3 * PW]
        e22 = res[:, 3 * PW:4 * PW]
        e12 = res[:, 4 * PW:5 * PW]

        mu1_sq = mu1 * mu1
        mu2_sq = mu2 * mu2
        mu1_mu2 = mu1 * mu2
        sigma1_sq = e11 - mu1_sq
        sigma2_sq = e22 - mu2_sq
        sigma12 = e12 - mu1_mu2

        v1 = 2.0 * sigma12 + C2
        v2 = sigma1_sq + sigma2_sq + C2
        ssim_map = (2.0 * mu1_mu2 + C1) * v1 / ((mu1_sq + mu2_sq + C1) * v2)

        lane = jax.lax.broadcasted_iota(jnp.int32, (Hout, PW), 1)
        valid = (lane % W) < Wout
        colsum = jnp.sum(jnp.where(valid, ssim_map, 0.0),
                         axis=0, keepdims=True)                 # (1, P*W)

        # Lane-dense (P*W % 128 == 0) unmasked store; row 0 carries the
        # per-column sums, rows 1..7 are zero (no 8-row broadcast).
        row = jax.lax.broadcasted_iota(jnp.int32, (8, PW), 0)
        out_ref[...] = jnp.where(row == 0, colsum, 0.0)[None]

    return kernel


def ssim_loss(img1: jax.Array, img2: jax.Array, img_range: float,
              window_size: int = 11, sigma: float = 1.5) -> jax.Array:
    """Equivalent of SSIMLoss(img_range, window_size).forward(img1, img2)."""
    B, C, H, W = img1.shape
    ws = min(window_size, H, W)
    Hout, Wout = H - ws + 1, W - ws + 1
    g = _gaussian_1d(ws, sigma)
    C1 = (0.01 * img_range) ** 2
    C2 = (0.03 * img_range) ** 2
    Gv_np = _gv_matrix(H, ws, g)

    vmem_cap = _vmem_capacity_bytes()
    budget = int(0.75 * vmem_cap)           # planning budget (leave headroom)
    vmem_limit = int(0.90 * vmem_cap)       # compiler limit below physical

    in_bytes = jnp.dtype(img1.dtype).itemsize
    N = B * C
    P = _choose_planes_per_step(N, H, W, Hout, in_bytes, budget)
    G = -(-N // P)
    Npad = G * P
    PW = P * W

    gv = jnp.asarray(Gv_np)                 # (Hout, H) f32

    def to_lane_packed(x):
        # (B, C, H, W) -> (H, Npad*W): planes tiled along the lane axis.
        # Input dtype (e.g. bf16) is preserved; the kernel upcasts per tile.
        # TODO(synk): for W % 128 == 0 feed (P, H, W) blocks directly and skip
        # this wrapper-side HBM transpose (extra read+write of both inputs).
        x = x.reshape(N, H, W)
        if Npad != N:
            x = jnp.pad(x, ((0, Npad - N), (0, 0), (0, 0)))
        return jnp.transpose(x, (1, 0, 2)).reshape(H, Npad * W)

    x1 = to_lane_packed(img1)
    x2 = to_lane_packed(img2)

    kernel = _make_ssim_kernel(C1, C2, g, ws, W, Wout, P)

    out = pl.pallas_call(
        kernel,
        out_shape=jax.ShapeDtypeStruct((G, 8, PW), jnp.float32),
        grid_spec=pltpu.PrefetchScalarGridSpec(
            num_scalar_prefetch=0,
            grid=(G,),
            in_specs=[
                pl.BlockSpec((H, PW), lambda i: (0, i)),
                pl.BlockSpec((H, PW), lambda i: (0, i)),
                pl.BlockSpec((Hout, H), lambda i: (0, 0)),
            ],
            out_specs=pl.BlockSpec((1, 8, PW), lambda i: (i, 0, 0)),
        ),
        compiler_params=pltpu.CompilerParams(
            dimension_semantics=("parallel",),
            vmem_limit_bytes=vmem_limit),
    )(x1, x2, gv)

    # Row 0 of each block holds the per-column sums (invalid / cross-plane
    # lanes already zeroed in-kernel); drop padded planes and finish here.
    col_sums = out[:, 0, :].reshape(Npad, W)[:N]      # (N, W)
    total = jnp.sum(col_sums)
    return total / float(N * Hout * Wout)


def _ssim_reference_np(img1, img2, img_range, window_size=11, sigma=1.5):
    """Pure-numpy (f64) reproduction of the PyTorch reference (validation)."""
    img1 = np.asarray(img1, dtype=np.float64)
    img2 = np.asarray(img2, dtype=np.float64)
    B, C, H, W = img1.shape
    ws = min(window_size, H, W)
    g = _gaussian_1d(ws, sigma).astype(np.float64)
    win2d = np.outer(g, g)
    Hout, Wout = H - ws + 1, W - ws + 1

    def conv(x):
        out = np.zeros((B, C, Hout, Wout), dtype=np.float64)
        for i in range(ws):
            for j in range(ws):
                out += win2d[i, j] * x[:, :, i:i + Hout, j:j + Wout]
        return out

    mu1, mu2 = conv(img1), conv(img2)
    mu1_sq, mu2_sq, mu1_mu2 = mu1 ** 2, mu2 ** 2, mu1 * mu2
    s1 = conv(img1 ** 2) - mu1_sq
    s2 = conv(img2 ** 2) - mu2_sq
    s12 = conv(img1 * img2) - mu1_mu2
    C1 = (0.01 * img_range) ** 2
    C2 = (0.03 * img_range) ** 2
    v1 = 2.0 * s12 + C2
    v2 = s1 + s2 + C2
    ssim_map = (2 * mu1_mu2 + C1) * v1 / ((mu1_sq + mu2_sq + C1) * v2)
    return ssim_map.mean()


if __name__ == "__main__":
    B, C, H, W = 2, 4, 16, 16
    img_range = 2.0           # e.g. images in [-1, 1]
    window_size = 11

    key = jax.random.PRNGKey(0)
    k1, k2 = jax.random.split(key)
    img1 = jax.random.uniform(k1, (B, C, H, W), jnp.float32, -1.0, 1.0)
    img2 = jax.random.uniform(k2, (B, C, H, W), jnp.float32, -1.0, 1.0)

    fn = jax.jit(lambda a, b: ssim_loss(a, b, img_range, window_size))
    out = jax.block_until_ready(fn(img1, img2))

    ref = _ssim_reference_np(img1, img2, img_range, window_size)
    np.testing.assert_allclose(np.asarray(out), float(ref), rtol=2e-4, atol=2e-5)

    print("KERNEL_OK")
</pallas_src>

<mosaic_0001>
module attributes {stable_mosaic.version = 11 : i64} {
  func.func @kernel(%arg0: i32, %arg1: memref<16x128xf32, #tpu.memory_space<vmem>>, %arg2: memref<16x128xf32, #tpu.memory_space<vmem>>, %arg3: memref<6x16xf32, #tpu.memory_space<vmem>>, %arg4: memref<1x8x128xf32, #tpu.memory_space<vmem>>) attributes {dimension_semantics = [#tpu.dimension_semantics<parallel>], iteration_bounds = array<i64: 1>, scalar_prefetch = 0 : i64, scratch_operands = 0 : i64, tpu.core_type = #tpu.core_type<tc>, window_params = [{transform_indices = @transform_0, window_bounds = array<i64: 16, 128>}, {transform_indices = @transform_1, window_bounds = array<i64: 16, 128>}, {pipeline_mode = #tpu.pipeline_mode<synchronous>, transform_indices = @transform_2, window_bounds = array<i64: 6, 16>}, {transform_indices = @transform_3, window_bounds = array<i64: 1, 8, 128>}]} {
    %c0 = arith.constant 0 : index
    %c0_0 = arith.constant 0 : index
    %0 = vector.load %arg1[%c0, %c0_0] : memref<16x128xf32, #tpu.memory_space<vmem>>, vector<16x128xf32>
    %c0_1 = arith.constant 0 : index
    %c0_2 = arith.constant 0 : index
    %1 = vector.load %arg2[%c0_1, %c0_2] : memref<16x128xf32, #tpu.memory_space<vmem>>, vector<16x128xf32>
    %c0_3 = arith.constant 0 : index
    %c0_4 = arith.constant 0 : index
    %2 = vector.load %arg3[%c0_3, %c0_4] : memref<6x16xf32, #tpu.memory_space<vmem>>, vector<6x16xf32>
    %3 = arith.mulf %0, %0 : vector<16x128xf32>
    %4 = arith.mulf %1, %1 : vector<16x128xf32>
    %5 = arith.mulf %0, %1 : vector<16x128xf32>
    %6 = tpu.concatenate %0, %1, %3, %4, %5 in 1 : vector<16x128xf32>, vector<16x128xf32>, vector<16x128xf32>, vector<16x128xf32>, vector<16x128xf32> -> vector<16x640xf32>
    %7 = arith.truncf %2 : vector<6x16xf32> to vector<6x16xbf16>
    %8 = arith.extf %7 : vector<6x16xbf16> to vector<6x16xf32>
    %9 = arith.subf %2, %8 : vector<6x16xf32>
    %10 = arith.truncf %9 : vector<6x16xf32> to vector<6x16xbf16>
    %11 = arith.truncf %6 : vector<16x640xf32> to vector<16x640xbf16>
    %12 = arith.extf %11 : vector<16x640xbf16> to vector<16x640xf32>
    %13 = arith.subf %6, %12 : vector<16x640xf32>
    %14 = arith.truncf %13 : vector<16x640xf32> to vector<16x640xbf16>
    %cst = arith.constant dense<0.000000e+00> : vector<6x640xf32>
    %15 = tpu.matmul %7, %11, %cst {dimension_numbers = #tpu.dot_dimension_numbers<[1], [0], [0], [1], [0, 0, 1, 1], [], []>} : vector<6x16xbf16>, vector<16x640xbf16>, vector<6x640xf32> -> vector<6x640xf32>
    %cst_5 = arith.constant dense<0.000000e+00> : vector<6x640xf32>
    %16 = tpu.matmul %7, %14, %cst_5 {dimension_numbers = #tpu.dot_dimension_numbers<[1], [0], [0], [1], [0, 0, 1, 1], [], []>} : vector<6x16xbf16>, vector<16x640xbf16>, vector<6x640xf32> -> vector<6x640xf32>
    %17 = arith.addf %15, %16 : vector<6x640xf32>
    %cst_6 = arith.constant dense<0.000000e+00> : vector<6x640xf32>
    %18 = tpu.matmul %10, %11, %cst_6 {dimension_numbers = #tpu.dot_dimension_numbers<[1], [0], [0], [1], [0, 0, 1, 1], [], []>} : vector<6x16xbf16>, vector<16x640xbf16>, vector<6x640xf32> -> vector<6x640xf32>
    %19 = arith.addf %17, %18 : vector<6x640xf32>
    %20 = vector.extract_strided_slice %19 {offsets = [0, 0], sizes = [6, 630], strides = [1, 1]} : vector<6x640xf32> to vector<6x630xf32>
    %cst_7 = arith.constant 0.00102838012 : f32
    %21 = vector.broadcast %cst_7 : f32 to vector<6x630xf32>
    %22 = arith.mulf %21, %20 : vector<6x630xf32>
    %23 = vector.extract_strided_slice %19 {offsets = [0, 1], sizes = [6, 630], strides = [1, 1]} : vector<6x640xf32> to vector<6x630xf32>
    %cst_8 = arith.constant 0.00759875821 : f32
    %24 = vector.broadcast %cst_8 : f32 to vector<6x630xf32>
    %25 = arith.mulf %24, %23 : vector<6x630xf32>
    %26 = arith.addf %22, %25 : vector<6x630xf32>
    %27 = vector.extract_strided_slice %19 {offsets = [0, 2], sizes = [6, 630], strides = [1, 1]} : vector<6x640xf32> to vector<6x630xf32>
    %cst_9 = arith.constant 0.0360007733 : f32
    %28 = vector.broadcast %cst_9 : f32 to vector<6x630xf32>
    %29 = arith.mulf %28, %27 : vector<6x630xf32>
    %30 = arith.addf %26, %29 : vector<6x630xf32>
    %31 = vector.extract_strided_slice %19 {offsets = [0, 3], sizes = [6, 630], strides = [1, 1]} : vector<6x640xf32> to vector<6x630xf32>
    %cst_10 = arith.constant 0.109360687 : f32
    %32 = vector.broadcast %cst_10 : f32 to vector<6x630xf32>
    %33 = arith.mulf %32, %31 : vector<6x630xf32>
    %34 = arith.addf %30, %33 : vector<6x630xf32>
    %35 = vector.extract_strided_slice %19 {offsets = [0, 4], sizes = [6, 630], strides = [1, 1]} : vector<6x640xf32> to vector<6x630xf32>
    %cst_11 = arith.constant 0.213005543 : f32
    %36 = vector.broadcast %cst_11 : f32 to vector<6x630xf32>
    %37 = arith.mulf %36, %35 : vector<6x630xf32>
    %38 = arith.addf %34, %37 : vector<6x630xf32>
    %39 = vector.extract_strided_slice %19 {offsets = [0, 5], sizes = [6, 630], strides = [1, 1]} : vector<6x640xf32> to vector<6x630xf32>
    %cst_12 = arith.constant 0.266011715 : f32
    %40 = vector.broadcast %cst_12 : f32 to vector<6x630xf32>
    %41 = arith.mulf %40, %39 : vector<6x630xf32>
    %42 = arith.addf %38, %41 : vector<6x630xf32>
    %43 = vector.extract_strided_slice %19 {offsets = [0, 6], sizes = [6, 630], strides = [1, 1]} : vector<6x640xf32> to vector<6x630xf32>
    %cst_13 = arith.constant 0.213005543 : f32
    %44 = vector.broadcast %cst_13 : f32 to vector<6x630xf32>
    %45 = arith.mulf %44, %43 : vector<6x630xf32>
    %46 = arith.addf %42, %45 : vector<6x630xf32>
    %47 = vector.extract_strided_slice %19 {offsets = [0, 7], sizes = [6, 630], strides = [1, 1]} : vector<6x640xf32> to vector<6x630xf32>
    %cst_14 = arith.constant 0.109360687 : f32
    %48 = vector.broadcast %cst_14 : f32 to vector<6x630xf32>
    %49 = arith.mulf %48, %47 : vector<6x630xf32>
    %50 = arith.addf %46, %49 : vector<6x630xf32>
    %51 = vector.extract_strided_slice %19 {offsets = [0, 8], sizes = [6, 630], strides = [1, 1]} : vector<6x640xf32> to vector<6x630xf32>
    %cst_15 = arith.constant 0.0360007733 : f32
    %52 = vector.broadcast %cst_15 : f32 to vector<6x630xf32>
    %53 = arith.mulf %52, %51 : vector<6x630xf32>
    %54 = arith.addf %50, %53 : vector<6x630xf32>
    %55 = vector.extract_strided_slice %19 {offsets = [0, 9], sizes = [6, 630], strides = [1, 1]} : vector<6x640xf32> to vector<6x630xf32>
    %cst_16 = arith.constant 0.00759875821 : f32
    %56 = vector.broadcast %cst_16 : f32 to vector<6x630xf32>
    %57 = arith.mulf %56, %55 : vector<6x630xf32>
    %58 = arith.addf %54, %57 : vector<6x630xf32>
    %59 = vector.extract_strided_slice %19 {offsets = [0, 10], sizes = [6, 630], strides = [1, 1]} : vector<6x640xf32> to vector<6x630xf32>
    %cst_17 = arith.constant 0.00102838012 : f32
    %60 = vector.broadcast %cst_17 : f32 to vector<6x630xf32>
    %61 = arith.mulf %60, %59 : vector<6x630xf32>
    %62 = arith.addf %58, %61 : vector<6x630xf32>
    %c0_i32 = arith.constant 0 : i32
    %63 = arith.sitofp %c0_i32 : i32 to f32
    %64 = vector.broadcast %63 : f32 to vector<6x10xf32>
    %65 = tpu.concatenate %62, %64 in 1 : vector<6x630xf32>, vector<6x10xf32> -> vector<6x640xf32>
    %66 = vector.extract_strided_slice %65 {offsets = [0, 0], sizes = [6, 128], strides = [1, 1]} : vector<6x640xf32> to vector<6x128xf32>
    %67 = vector.extract_strided_slice %65 {offsets = [0, 128], sizes = [6, 128], strides = [1, 1]} : vector<6x640xf32> to vector<6x128xf32>
    %68 = vector.extract_strided_slice %65 {offsets = [0, 256], sizes = [6, 128], strides = [1, 1]} : vector<6x640xf32> to vector<6x128xf32>
    %69 = vector.extract_strided_slice %65 {offsets = [0, 384], sizes = [6, 128], strides = [1, 1]} : vector<6x640xf32> to vector<6x128xf32>
    %70 = vector.extract_strided_slice %65 {offsets = [0, 512], sizes = [6, 128], strides = [1, 1]} : vector<6x640xf32> to vector<6x128xf32>
    %71 = arith.mulf %66, %66 : vector<6x128xf32>
    %72 = arith.mulf %67, %67 : vector<6x128xf32>
    %73 = arith.mulf %66, %67 : vector<6x128xf32>
    %74 = arith.subf %68, %71 : vector<6x128xf32>
    %75 = arith.subf %69, %72 : vector<6x128xf32>
    %76 = arith.subf %70, %73 : vector<6x128xf32>
    %cst_18 = arith.constant 2.000000e+00 : f32
    %77 = vector.broadcast %cst_18 : f32 to vector<6x128xf32>
    %78 = arith.mulf %77, %76 : vector<6x128xf32>
    %cst_19 = arith.constant 3.600000e-03 : f32
    %79 = vector.broadcast %cst_19 : f32 to vector<6x128xf32>
    %80 = arith.addf %78, %79 : vector<6x128xf32>
    %81 = arith.addf %74, %75 : vector<6x128xf32>
    %cst_20 = arith.constant 3.600000e-03 : f32
    %82 = vector.broadcast %cst_20 : f32 to vector<6x128xf32>
    %83 = arith.addf %81, %82 : vector<6x128xf32>
    %cst_21 = arith.constant 2.000000e+00 : f32
    %84 = vector.broadcast %cst_21 : f32 to vector<6x128xf32>
    %85 = arith.mulf %84, %73 : vector<6x128xf32>
    %cst_22 = arith.constant 4.000000e-04 : f32
    %86 = vector.broadcast %cst_22 : f32 to vector<6x128xf32>
    %87 = arith.addf %85, %86 : vector<6x128xf32>
    %88 = arith.mulf %87, %80 : vector<6x128xf32>
    %89 = arith.addf %71, %72 : vector<6x128xf32>
    %cst_23 = arith.constant 4.000000e-04 : f32
    %90 = vector.broadcast %cst_23 : f32 to vector<6x128xf32>
    %91 = arith.addf %89, %90 : vector<6x128xf32>
    %92 = arith.mulf %91, %83 : vector<6x128xf32>
    %93 = arith.divf %88, %92 : vector<6x128xf32>
    %94 = tpu.iota {dimensions = array<i32: 1>} : vector<6x128xi32>
    %c16_i32 = arith.constant 16 : i32
    %c0_i32_24 = arith.constant 0 : i32
    %95 = arith.cmpi eq, %c16_i32, %c0_i32_24 : i32
    %c1_i32 = arith.constant 1 : i32
    %96 = arith.select %95, %c1_i32, %c16_i32 : i32
    %97 = vector.broadcast %96 : i32 to vector<6x128xi32>
    %98 = arith.remsi %94, %97 : vector<6x128xi32>
    %c0_i32_25 = arith.constant 0 : i32
    %99 = vector.broadcast %c0_i32_25 : i32 to vector<6x128xi32>
    %100 = arith.cmpi ne, %98, %99 : vector<6x128xi32>
    %c0_i32_26 = arith.constant 0 : i32
    %101 = vector.broadcast %c0_i32_26 : i32 to vector<6x128xi32>
    %102 = arith.cmpi slt, %98, %101 : vector<6x128xi32>
    %c0_i32_27 = arith.constant 0 : i32
    %103 = arith.cmpi slt, %96, %c0_i32_27 : i32
    %104 = vector.broadcast %103 : i1 to vector<6x128xi1>
    %105 = vector.broadcast %104 : vector<6x128xi1> to vector<6x128xi1>
    %106 = arith.xori %102, %105 : vector<6x128xi1>
    %107 = arith.andi %106, %100 : vector<6x128xi1>
    %108 = vector.broadcast %96 : i32 to vector<6x128xi32>
    %109 = arith.addi %98, %108 : vector<6x128xi32>
    %110 = arith.select %107, %109, %98 : vector<6x128xi1>, vector<6x128xi32>
    %c6_i32 = arith.constant 6 : i32
    %111 = vector.broadcast %c6_i32 : i32 to vector<6x128xi32>
    %112 = arith.cmpi slt, %110, %111 : vector<6x128xi32>
    %cst_28 = arith.constant 0.000000e+00 : f32
    %113 = vector.broadcast %cst_28 : f32 to vector<6x128xf32>
    %114 = arith.select %112, %93, %113 : vector<6x128xi1>, vector<6x128xf32>
    %cst_29 = arith.constant dense<0.000000e+00> : vector<128xf32>
    %115 = vector.multi_reduction <add>, %114, %cst_29 [0] : vector<6x128xf32> to vector<128xf32>
    %116 = vector.shape_cast %115 : vector<128xf32> to vector<1x128xf32>
    %117 = tpu.iota {dimensions = array<i32: 0>} : vector<8x128xi32>
    %c0_i32_30 = arith.constant 0 : i32
    %118 = vector.broadcast %c0_i32_30 : i32 to vector<8x128xi32>
    %119 = arith.cmpi eq, %117, %118 : vector<8x128xi32>
    %cst_31 = arith.constant 0.000000e+00 : f32
    %120 = vector.shape_cast %116 : vector<1x128xf32> to vector<1x128xf32>
    %121 = vector.broadcast %120 : vector<1x128xf32> to vector<8x128xf32>
    %122 = vector.broadcast %cst_31 : f32 to vector<8x128xf32>
    %123 = arith.select %119, %121, %122 : vector<8x128xi1>, vector<8x128xf32>
    %124 = vector.shape_cast %123 : vector<8x128xf32> to vector<1x8x128xf32>
    %c0_32 = arith.constant 0 : index
    %c0_33 = arith.constant 0 : index
    %c0_34 = arith.constant 0 : index
    %125 = vector.load %arg4[%c0_32, %c0_33, %c0_34] : memref<1x8x128xf32, #tpu.memory_space<vmem>>, vector<1x8x128xf32>
    tpu.vector_store %arg4[%c0_32, %c0_33, %c0_34], %124 {strides = array<i32>} : memref<1x8x128xf32, #tpu.memory_space<vmem>>, vector<1x8x128xf32>,
    return
  }
  func.func @transform_0(%arg0: i32) -> (i32, i32) {
    %c0_i32 = arith.constant 0 : i32
    %c0_i32_0 = arith.constant 0 : i32
    return %c0_i32, %arg0 : i32, i32
  }
  func.func @transform_1(%arg0: i32) -> (i32, i32) {
    %c0_i32 = arith.constant 0 : i32
    %c0_i32_0 = arith.constant 0 : i32
    return %c0_i32, %arg0 : i32, i32
  }
  func.func @transform_2(%arg0: i32) -> (i32, i32) {
    %c0_i32 = arith.constant 0 : i32
    %c0_i32_0 = arith.constant 0 : i32
    %c0_i32_1 = arith.constant 0 : i32
    return %c0_i32, %c0_i32_0 : i32, i32
  }
  func.func @transform_3(%arg0: i32) -> (i32, i32, i32) {
    %c0_i32 = arith.constant 0 : i32
    %c0_i32_0 = arith.constant 0 : i32
    %c0_i32_1 = arith.constant 0 : i32
    return %arg0, %c0_i32, %c0_i32_0 : i32, i32, i32
  }
}

</mosaic_0001>

<llo_original>
// kernel: _lambda_.1
$region0: #{_lambda_.1}
  #allocation0 [shape = 'u32[]', space=smem, size = 0x4, offset = 0x4, fixed_abs, tag = 'smem constant byte address 0x4 - core index']
  #allocation1 [shape = 'u32[72,128]{1,0:T(1,128)}', space=vmem, size = 0x9000, scoped, tag = 'internal scratch']
  %s0 = inlined_call_operand.vmem [shape: f32[16,128], index: 0, kind: input, shape index: {}]
  %s1 = inlined_call_operand.vmem [shape: f32[16,128], index: 1, kind: input, shape index: {}]
  %s2 = inlined_call_operand.vmem [shape: f32[6,16], index: 2, kind: input, shape index: {}]
  %s3 = inlined_call_operand.vmem [shape: f32[1,8,128], index: 3, kind: output, shape index: {}]
  %s4 = sld [smem:[#allocation0]]
  $region22: #{_lambda_.1} parent=0
    _
  %s6 = ssub.s32 1, %s4
  %s7 = scalar_select 0, %s6, %s4
  // Predicated region
  $region2: #{_lambda_.1} parent=0 // pred_check
    _
  $region3: #{_lambda_.1} parent=0 // pred_check_branch
    %9 = sbr.rel (0) target = $region5
  $region4: #{_lambda_.1} parent=0 // pred_region
    _
  $region5: #{_lambda_.1} parent=0 // pred_fallthru
    _
  // Predicated region
  $region6: #{_lambda_.1} parent=0 // pred_check
    _
  $region7: #{_lambda_.1} parent=0 // pred_check_branch
    %11 = sbr.rel (0) target = $region9
  $region8: #{_lambda_.1} parent=0 // pred_region
    _
  $region9: #{_lambda_.1} parent=0 // pred_fallthru
    _
  // Predicated region
  $region10: #{_lambda_.1} parent=0 // pred_check
    _
  $region11: #{_lambda_.1} parent=0 // pred_check_branch
    %13 = sbr.rel (0) target = $region13
  $region12: #{_lambda_.1} parent=0 // pred_region
    _
  $region13: #{_lambda_.1} parent=0 // pred_fallthru
    _
  %v15 = vld [vmem:[%s0] sm:$0xff]
  %v16 = vld [vmem:[%s0 + $0x8] sm:$0xff]
  %v17 = vld [vmem:[%s1] sm:$0xff]
  %v18 = vld [vmem:[%s1 + $0x8] sm:$0xff]
  %v19 = vld [vmem:[%s2] sm:$0x3f]
  %v20 = vmul.f32 %v15, %v15
  %v21 = vmul.f32 %v16, %v16
  %v22 = vmul.f32 %v17, %v17
  %v23 = vmul.f32 %v18, %v18
  %v24 = vmul.f32 %v15, %v17
  %v25 = vmul.f32 %v16, %v18
  %v26 = vpack.c.bf16 %v19, %v19
  %v27 = vunpack.c.l.bf16 %v26
  %v28 = vsub.f32 %v19, %v27
  %v29 = vpack.c.bf16 %v28, %v28
  %v30 = vpack.c.bf16 %v17, %v15
  %v31 = vpack.c.bf16 %v22, %v20
  %v32 = vpack.c.bf16 %v24, %v24
  %v33 = vpack.c.bf16 %v18, %v16
  %v34 = vpack.c.bf16 %v23, %v21
  %v35 = vpack.c.bf16 %v25, %v25
  %v36 = vunpack.c.l.bf16 %v30
  %v37 = vunpack.c.h.bf16 %v30
  %v38 = vunpack.c.l.bf16 %v31
  %v39 = vunpack.c.h.bf16 %v31
  %v40 = vunpack.c.l.bf16 %v32
  %v41 = vunpack.c.l.bf16 %v33
  %v42 = vunpack.c.h.bf16 %v33
  %v43 = vunpack.c.l.bf16 %v34
  %v44 = vunpack.c.h.bf16 %v34
  %v45 = vunpack.c.l.bf16 %v35
  %v46 = vsub.f32 %v15, %v36
  %v47 = vsub.f32 %v17, %v37
  %v48 = vsub.f32 %v20, %v38
  %v49 = vsub.f32 %v22, %v39
  %v50 = vsub.f32 %v24, %v40
  %v51 = vsub.f32 %v16, %v41
  %v52 = vsub.f32 %v18, %v42
  %v53 = vsub.f32 %v21, %v43
  %v54 = vsub.f32 %v23, %v44
  %v55 = vsub.f32 %v25, %v45
  %v56 = vpack.c.bf16 %v51, %v46
  %v57 = vpack.c.bf16 %v52, %v47
  %v58 = vpack.c.bf16 %v53, %v48
  %v59 = vpack.c.bf16 %v54, %v49
  %v60 = vpack.c.bf16 %v55, %v50
  %vm61 = vcmask 130048
  %v63 = vsel %vm61, %v26, 0
  %65 = vmatpush.bf16.msra.mxu0 0
  %66 = vmatpush.bf16.msra.mxu0 0
  %67 = vmatpush.bf16.msra.mxu0 0
  %68 = vmatpush.bf16.msra.mxu0 0
  %69 = vmatpush.bf16.msra.mxu0 0
  %70 = vmatpush.bf16.msra.mxu0 0
  %71 = vmatpush.bf16.msra.mxu0 0
  %72 = vmatpush.bf16.msra.mxu0 %v56
  %73 = vmatmul.bf16.gmra.mxu0 %v63
  %v74 = vpop.f32.mrf.mxu0
  %v75 = vadd.f32 0.0, %v74
  %v76 = vpop.f32.mrf.mxu0
  %77 = vdwg.mxu0
  %78 = vmatpush.bf16.msra.mxu0 0
  %79 = vmatpush.bf16.msra.mxu0 0
  %80 = vmatpush.bf16.msra.mxu0 0
  %81 = vmatpush.bf16.msra.mxu0 0
  %82 = vmatpush.bf16.msra.mxu0 0
  %83 = vmatpush.bf16.msra.mxu0 0
  %84 = vmatpush.bf16.msra.mxu0 0
  %85 = vmatpush.bf16.msra.mxu0 %v57
  %86 = vmatmul.bf16.gmra.mxu0 %v63
  %v87 = vpop.f32.mrf.mxu0
  %v88 = vadd.f32 0.0, %v87
  %v89 = vpop.f32.mrf.mxu0
  %90 = vdwg.mxu0
  %91 = vmatpush.bf16.msra.mxu0 0
  %92 = vmatpush.bf16.msra.mxu0 0
  %93 = vmatpush.bf16.msra.mxu0 0
  %94 = vmatpush.bf16.msra.mxu0 0
  %95 = vmatpush.bf16.msra.mxu0 0
  %96 = vmatpush.bf16.msra.mxu0 0
  %97 = vmatpush.bf16.msra.mxu0 0
  %98 = vmatpush.bf16.msra.mxu0 %v58
  %99 = vmatmul.bf16.gmra.mxu0 %v63
  %v100 = vpop.f32.mrf.mxu0
  %v101 = vadd.f32 0.0, %v100
  %v102 = vpop.f32.mrf.mxu0
  %103 = vdwg.mxu0
  %104 = vmatpush.bf16.msra.mxu0 0
  %105 = vmatpush.bf16.msra.mxu0 0
  %106 = vmatpush.bf16.msra.mxu0 0
  %107 = vmatpush.bf16.msra.mxu0 0
  %108 = vmatpush.bf16.msra.mxu0 0
  %109 = vmatpush.bf16.msra.mxu0 0
  %110 = vmatpush.bf16.msra.mxu0 0
  %111 = vmatpush.bf16.msra.mxu0 %v59
  %112 = vmatmul.bf16.gmra.mxu0 %v63
  %v113 = vpop.f32.mrf.mxu0
  %v114 = vadd.f32 0.0, %v113
  %v115 = vpop.f32.mrf.mxu0
  %116 = vdwg.mxu0
  %117 = vmatpush.bf16.msra.mxu0 0
  %118 = vmatpush.bf16.msra.mxu0 0
  %119 = vmatpush.bf16.msra.mxu0 0
  %120 = vmatpush.bf16.msra.mxu0 0
  %121 = vmatpush.bf16.msra.mxu0 0
  %122 = vmatpush.bf16.msra.mxu0 0
  %123 = vmatpush.bf16.msra.mxu0 0
  %124 = vmatpush.bf16.msra.mxu0 %v60
  %125 = vmatmul.bf16.gmra.mxu0 %v63
  %v126 = vpop.f32.mrf.mxu0
  %v127 = vadd.f32 0.0, %v126
  %v128 = vpop.f32.mrf.mxu0
  %129 = vdwg.mxu0
  %v136 = vunpack.c.l.b16 %v30
  %v137 = vunpack.c.h.b16 %v30
  %v138 = vunpack.c.l.b16 %v31
  %v139 = vunpack.c.h.b16 %v31
  %v140 = vunpack.c.l.b16 %v32
  %v141 = vunpack.c.l.b16 %v33
  %v142 = vunpack.c.h.b16 %v33
  %v143 = vunpack.c.l.b16 %v34
  %v144 = vunpack.c.h.b16 %v34
  %v145 = vunpack.c.l.b16 %v35
  %v146 = vpack.c.b16 %v141, %v136
  %v147 = vpack.c.b16 %v142, %v137
  %v148 = vpack.c.b16 %v143, %v138
  %v149 = vpack.c.b16 %v144, %v139
  %v150 = vpack.c.b16 %v145, %v140
  %156 = vmatpush.bf16.msra.mxu0 0
  %157 = vmatpush.bf16.msra.mxu0 0
  %158 = vmatpush.bf16.msra.mxu0 0
  %159 = vmatpush.bf16.msra.mxu0 0
  %160 = vmatpush.bf16.msra.mxu0 0
  %161 = vmatpush.bf16.msra.mxu0 0
  %162 = vmatpush.bf16.msra.mxu0 0
  %163 = vmatpush.bf16.msra.mxu0 %v146
  %164 = vmatmul.bf16.gmra.mxu0 %v63
  %v165 = vpop.f32.mrf.mxu0
  %v166 = vadd.f32 %v75, %v165
  %v167 = vpop.f32.mrf.mxu0
  %168 = vdwg.mxu0
  %169 = vmatpush.bf16.msra.mxu0 0
  %170 = vmatpush.bf16.msra.mxu0 0
  %171 = vmatpush.bf16.msra.mxu0 0
  %172 = vmatpush.bf16.msra.mxu0 0
  %173 = vmatpush.bf16.msra.mxu0 0
  %174 = vmatpush.bf16.msra.mxu0 0
  %175 = vmatpush.bf16.msra.mxu0 0
  %176 = vmatpush.bf16.msra.mxu0 %v147
  %177 = vmatmul.bf16.gmra.mxu0 %v63
  %v178 = vpop.f32.mrf.mxu0
  %v179 = vadd.f32 %v88, %v178
  %v180 = vpop.f32.mrf.mxu0
  %181 = vdwg.mxu0
  %182 = vmatpush.bf16.msra.mxu0 0
  %183 = vmatpush.bf16.msra.mxu0 0
  %184 = vmatpush.bf16.msra.mxu0 0
  %185 = vmatpush.bf16.msra.mxu0 0
  %186 = vmatpush.bf16.msra.mxu0 0
  %187 = vmatpush.bf16.msra.mxu0 0
  %188 = vmatpush.bf16.msra.mxu0 0
  %189 = vmatpush.bf16.msra.mxu0 %v148
  %190 = vmatmul.bf16.gmra.mxu0 %v63
  %v191 = vpop.f32.mrf.mxu0
  %v192 = vadd.f32 %v101, %v191
  %v193 = vpop.f32.mrf.mxu0
  %194 = vdwg.mxu0
  %195 = vmatpush.bf16.msra.mxu0 0
  %196 = vmatpush.bf16.msra.mxu0 0
  %197 = vmatpush.bf16.msra.mxu0 0
  %198 = vmatpush.bf16.msra.mxu0 0
  %199 = vmatpush.bf16.msra.mxu0 0
  %200 = vmatpush.bf16.msra.mxu0 0
  %201 = vmatpush.bf16.msra.mxu0 0
  %202 = vmatpush.bf16.msra.mxu0 %v149
  %203 = vmatmul.bf16.gmra.mxu0 %v63
  %v204 = vpop.f32.mrf.mxu0
  %v205 = vadd.f32 %v114, %v204
  %v206 = vpop.f32.mrf.mxu0
  %207 = vdwg.mxu0
  %208 = vmatpush.bf16.msra.mxu0 0
  %209 = vmatpush.bf16.msra.mxu0 0
  %210 = vmatpush.bf16.msra.mxu0 0
  %211 = vmatpush.bf16.msra.mxu0 0
  %212 = vmatpush.bf16.msra.mxu0 0
  %213 = vmatpush.bf16.msra.mxu0 0
  %214 = vmatpush.bf16.msra.mxu0 0
  %215 = vmatpush.bf16.msra.mxu0 %v150
  %216 = vmatmul.bf16.gmra.mxu0 %v63
  %v217 = vpop.f32.mrf.mxu0
  %v218 = vadd.f32 %v127, %v217
  %v219 = vpop.f32.mrf.mxu0
  %220 = vdwg.mxu0
  %v222 = vsel %vm61, %v29, 0
  %224 = vmatpush.bf16.msra.mxu0 0
  %225 = vmatpush.bf16.msra.mxu0 0
  %226 = vmatpush.bf16.msra.mxu0 0
  %227 = vmatpush.bf16.msra.mxu0 0
  %228 = vmatpush.bf16.msra.mxu0 0
  %229 = vmatpush.bf16.msra.mxu0 0
  %230 = vmatpush.bf16.msra.mxu0 0
  %231 = vmatpush.bf16.msra.mxu0 %v146
  %232 = vmatmul.bf16.gmra.mxu0 %v222
  %v233 = vpop.f32.mrf.mxu0
  %v234 = vadd.f32 0.0, %v233
  %v235 = vpop.f32.mrf.mxu0
  %236 = vdwg.mxu0
  %237 = vmatpush.bf16.msra.mxu0 0
  %238 = vmatpush.bf16.msra.mxu0 0
  %239 = vmatpush.bf16.msra.mxu0 0
  %240 = vmatpush.bf16.msra.mxu0 0
  %241 = vmatpush.bf16.msra.mxu0 0
  %242 = vmatpush.bf16.msra.mxu0 0
  %243 = vmatpush.bf16.msra.mxu0 0
  %244 = vmatpush.bf16.msra.mxu0 %v147
  %245 = vmatmul.bf16.gmra.mxu0 %v222
  %v246 = vpop.f32.mrf.mxu0
  %v247 = vadd.f32 0.0, %v246
  %v248 = vpop.f32.mrf.mxu0
  %249 = vdwg.mxu0
  %250 = vmatpush.bf16.msra.mxu0 0
  %251 = vmatpush.bf16.msra.mxu0 0
  %252 = vmatpush.bf16.msra.mxu0 0
  %253 = vmatpush.bf16.msra.mxu0 0
  %254 = vmatpush.bf16.msra.mxu0 0
  %255 = vmatpush.bf16.msra.mxu0 0
  %256 = vmatpush.bf16.msra.mxu0 0
  %257 = vmatpush.bf16.msra.mxu0 %v148
  %258 = vmatmul.bf16.gmra.mxu0 %v222
  %v259 = vpop.f32.mrf.mxu0
  %v260 = vadd.f32 0.0, %v259
  %v261 = vpop.f32.mrf.mxu0
  %262 = vdwg.mxu0
  %263 = vmatpush.bf16.msra.mxu0 0
  %264 = vmatpush.bf16.msra.mxu0 0
  %265 = vmatpush.bf16.msra.mxu0 0
  %266 = vmatpush.bf16.msra.mxu0 0
  %267 = vmatpush.bf16.msra.mxu0 0
  %268 = vmatpush.bf16.msra.mxu0 0
  %269 = vmatpush.bf16.msra.mxu0 0
  %270 = vmatpush.bf16.msra.mxu0 %v149
  %271 = vmatmul.bf16.gmra.mxu0 %v222
  %v272 = vpop.f32.mrf.mxu0
  %v273 = vadd.f32 0.0, %v272
  %v274 = vpop.f32.mrf.mxu0
  %275 = vdwg.mxu0
  %276 = vmatpush.bf16.msra.mxu0 0
  %277 = vmatpush.bf16.msra.mxu0 0
  %278 = vmatpush.bf16.msra.mxu0 0
  %279 = vmatpush.bf16.msra.mxu0 0
  %280 = vmatpush.bf16.msra.mxu0 0
  %281 = vmatpush.bf16.msra.mxu0 0
  %282 = vmatpush.bf16.msra.mxu0 0
  %283 = vmatpush.bf16.msra.mxu0 %v150
  %284 = vmatmul.bf16.gmra.mxu0 %v222
  %v285 = vpop.f32.mrf.mxu0
  %v286 = vadd.f32 0.0, %v285
  %v287 = vpop.f32.mrf.mxu0
  %288 = vdwg.mxu0
  %v289 = vadd.f32 %v166, %v234
  %v290 = vadd.f32 %v179, %v247
  %v291 = vadd.f32 %v192, %v260
  %v292 = vadd.f32 %v205, %v273
  %v293 = vadd.f32 %v218, %v286
  %v294 = vmul.f32 %v289, 0.0010283801
  %v295 = vmul.f32 %v290, 0.0010283801
  %v296 = vmul.f32 %v291, 0.0010283801
  %v297 = vmul.f32 %v292, 0.0010283801
  %v298 = vmul.f32 %v293, 0.0010283801
  %v299 = vmul.f32 %v289, 0.007598758
  %v300 = vmul.f32 %v290, 0.007598758
  %v301 = vmul.f32 %v291, 0.007598758
  %v302 = vmul.f32 %v292, 0.007598758
  %v303 = vmul.f32 %v293, 0.007598758
  %309 = vrot.lane.b32.xlu0 %v299, 127
  %v310 = vpop.permute.xlu0 %309
  %311 = vrot.lane.b32.xlu0 %v300, 127
  %v312 = vpop.permute.xlu0 %311
  %313 = vrot.lane.b32.xlu0 %v301, 127
  %v314 = vpop.permute.xlu0 %313
  %315 = vrot.lane.b32.xlu0 %v302, 127
  %v316 = vpop.permute.xlu0 %315
  %317 = vrot.lane.b32.xlu0 %v303, 127
  %v318 = vpop.permute.xlu0 %317
  %vm319 = vcmask 1039360
  %v320 = vsel %vm319, %v310, %v312
  %v321 = vsel %vm319, %v312, %v314
  %v322 = vsel %vm319, %v314, %v316
  %v323 = vsel %vm319, %v316, %v318
  %v329 = vadd.f32 %v294, %v320
  %v330 = vadd.f32 %v295, %v321
  %v331 = vadd.f32 %v296, %v322
  %v332 = vadd.f32 %v297, %v323
  %v333 = vadd.f32 %v298, %v318
  %v334 = vmul.f32 %v289, 0.036000773
  %v335 = vmul.f32 %v290, 0.036000773
  %v336 = vmul.f32 %v291, 0.036000773
  %v337 = vmul.f32 %v292, 0.036000773
  %v338 = vmul.f32 %v293, 0.036000773
  %344 = vrot.lane.b32.xlu0 %v334, 126
  %v345 = vpop.permute.xlu0 %344
  %346 = vrot.lane.b32.xlu0 %v335, 126
  %v347 = vpop.permute.xlu0 %346
  %348 = vrot.lane.b32.xlu0 %v336, 126
  %v349 = vpop.permute.xlu0 %348
  %350 = vrot.lane.b32.xlu0 %v337, 126
  %v351 = vpop.permute.xlu0 %350
  %352 = vrot.lane.b32.xlu0 %v338, 126
  %v353 = vpop.permute.xlu0 %352
  %vm354 = vcmask 1031168
  %v355 = vsel %vm354, %v345, %v347
  %v356 = vsel %vm354, %v347, %v349
  %v357 = vsel %vm354, %v349, %v351
  %v358 = vsel %vm354, %v351, %v353
  %v364 = vadd.f32 %v329, %v355
  %v365 = vadd.f32 %v330, %v356
  %v366 = vadd.f32 %v331, %v357
  %v367 = vadd.f32 %v332, %v358
  %v368 = vadd.f32 %v333, %v353
  %v369 = vmul.f32 %v289, 0.10936069
  %v370 = vmul.f32 %v290, 0.10936069
  %v371 = vmul.f32 %v291, 0.10936069
  %v372 = vmul.f32 %v292, 0.10936069
  %v373 = vmul.f32 %v293, 0.10936069
  %379 = vrot.lane.b32.xlu0 %v369, 125
  %v380 = vpop.permute.xlu0 %379
  %381 = vrot.lane.b32.xlu0 %v370, 125
  %v382 = vpop.permute.xlu0 %381
  %383 = vrot.lane.b32.xlu0 %v371, 125
  %v384 = vpop.permute.xlu0 %383
  %385 = vrot.lane.b32.xlu0 %v372, 125
  %v386 = vpop.permute.xlu0 %385
  %387 = vrot.lane.b32.xlu0 %v373, 125
  %v388 = vpop.permute.xlu0 %387
  %vm389 = vcmask 1022976
  %v390 = vsel %vm389, %v380, %v382
  %v391 = vsel %vm389, %v382, %v384
  %v392 = vsel %vm389, %v384, %v386
  %v393 = vsel %vm389, %v386, %v388
  %v399 = vadd.f32 %v364, %v390
  %v400 = vadd.f32 %v365, %v391
  %v401 = vadd.f32 %v366, %v392
  %v402 = vadd.f32 %v367, %v393
  %v403 = vadd.f32 %v368, %v388
  %v404 = vmul.f32 %v289, 0.21300554
  %v405 = vmul.f32 %v290, 0.21300554
  %v406 = vmul.f32 %v291, 0.21300554
  %v407 = vmul.f32 %v292, 0.21300554
  %v408 = vmul.f32 %v293, 0.21300554
  %414 = vrot.lane.b32.xlu0 %v404, 124
  %v415 = vpop.permute.xlu0 %414
  %416 = vrot.lane.b32.xlu0 %v405, 124
  %v417 = vpop.permute.xlu0 %416
  %418 = vrot.lane.b32.xlu0 %v406, 124
  %v419 = vpop.permute.xlu0 %418
  %420 = vrot.lane.b32.xlu0 %v407, 124
  %v421 = vpop.permute.xlu0 %420
  %422 = vrot.lane.b32.xlu0 %v408, 124
  %v423 = vpop.permute.xlu0 %422
  %vm424 = vcmask 1014784
  %v425 = vsel %vm424, %v415, %v417
  %v426 = vsel %vm424, %v417, %v419
  %v427 = vsel %vm424, %v419, %v421
  %v428 = vsel %vm424, %v421, %v423
  %v434 = vadd.f32 %v399, %v425
  %v435 = vadd.f32 %v400, %v426
  %v436 = vadd.f32 %v401, %v427
  %v437 = vadd.f32 %v402, %v428
  %v438 = vadd.f32 %v403, %v423
  %v439 = vmul.f32 %v289, 0.26601171
  %v440 = vmul.f32 %v290, 0.26601171
  %v441 = vmul.f32 %v291, 0.26601171
  %v442 = vmul.f32 %v292, 0.26601171
  %v443 = vmul.f32 %v293, 0.26601171
  %449 = vrot.lane.b32.xlu0 %v439, 123
  %v450 = vpop.permute.xlu0 %449
  %451 = vrot.lane.b32.xlu0 %v440, 123
  %v452 = vpop.permute.xlu0 %451
  %453 = vrot.lane.b32.xlu0 %v441, 123
  %v454 = vpop.permute.xlu0 %453
  %455 = vrot.lane.b32.xlu0 %v442, 123
  %v456 = vpop.permute.xlu0 %455
  %457 = vrot.lane.b32.xlu0 %v443, 123
  %v458 = vpop.permute.xlu0 %457
  %vm459 = vcmask 1006592
  %v460 = vsel %vm459, %v450, %v452
  %v461 = vsel %vm459, %v452, %v454
  %v462 = vsel %vm459, %v454, %v456
  %v463 = vsel %vm459, %v456, %v458
  %v469 = vadd.f32 %v434, %v460
  %v470 = vadd.f32 %v435, %v461
  %v471 = vadd.f32 %v436, %v462
  %v472 = vadd.f32 %v437, %v463
  %v473 = vadd.f32 %v438, %v458
  %474 = vrot.lane.b32.xlu0 %v404, 122
  %v475 = vpop.permute.xlu0 %474
  %476 = vrot.lane.b32.xlu0 %v405, 122
  %v477 = vpop.permute.xlu0 %476
  %478 = vrot.lane.b32.xlu0 %v406, 122
  %v479 = vpop.permute.xlu0 %478
  %480 = vrot.lane.b32.xlu0 %v407, 122
  %v481 = vpop.permute.xlu0 %480
  %482 = vrot.lane.b32.xlu0 %v408, 122
  %v483 = vpop.permute.xlu0 %482
  %vm484 = vcmask 998400
  %v485 = vsel %vm484, %v475, %v477
  %v486 = vsel %vm484, %v477, %v479
  %v487 = vsel %vm484, %v479, %v481
  %v488 = vsel %vm484, %v481, %v483
  %v494 = vadd.f32 %v469, %v485
  %v495 = vadd.f32 %v470, %v486
  %v496 = vadd.f32 %v471, %v487
  %v497 = vadd.f32 %v472, %v488
  %v498 = vadd.f32 %v473, %v483
  %499 = vrot.lane.b32.xlu0 %v369, 121
  %v500 = vpop.permute.xlu0 %499
  %501 = vrot.lane.b32.xlu0 %v370, 121
  %v502 = vpop.permute.xlu0 %501
  %503 = vrot.lane.b32.xlu0 %v371, 121
  %v504 = vpop.permute.xlu0 %503
  %505 = vrot.lane.b32.xlu0 %v372, 121
  %v506 = vpop.permute.xlu0 %505
  %507 = vrot.lane.b32.xlu0 %v373, 121
  %v508 = vpop.permute.xlu0 %507
  %vm509 = vcmask 990208
  %v510 = vsel %vm509, %v500, %v502
  %v511 = vsel %vm509, %v502, %v504
  %v512 = vsel %vm509, %v504, %v506
  %v513 = vsel %vm509, %v506, %v508
  %v519 = vadd.f32 %v494, %v510
  %v520 = vadd.f32 %v495, %v511
  %v521 = vadd.f32 %v496, %v512
  %v522 = vadd.f32 %v497, %v513
  %v523 = vadd.f32 %v498, %v508
  %524 = vrot.lane.b32.xlu0 %v334, 120
  %v525 = vpop.permute.xlu0 %524
  %526 = vrot.lane.b32.xlu0 %v335, 120
  %v527 = vpop.permute.xlu0 %526
  %528 = vrot.lane.b32.xlu0 %v336, 120
  %v529 = vpop.permute.xlu0 %528
  %530 = vrot.lane.b32.xlu0 %v337, 120
  %v531 = vpop.permute.xlu0 %530
  %532 = vrot.lane.b32.xlu0 %v338, 120
  %v533 = vpop.permute.xlu0 %532
  %vm534 = vcmask 982016
  %v535 = vsel %vm534, %v525, %v527
  %v536 = vsel %vm534, %v527, %v529
  %v537 = vsel %vm534, %v529, %v531
  %v538 = vsel %vm534, %v531, %v533
  %v544 = vadd.f32 %v519, %v535
  %v545 = vadd.f32 %v520, %v536
  %v546 = vadd.f32 %v521, %v537
  %v547 = vadd.f32 %v522, %v538
  %v548 = vadd.f32 %v523, %v533
  %549 = vrot.lane.b32.xlu0 %v299, 119
  %v550 = vpop.permute.xlu0 %549
  %551 = vrot.lane.b32.xlu0 %v300, 119
  %v552 = vpop.permute.xlu0 %551
  %553 = vrot.lane.b32.xlu0 %v301, 119
  %v554 = vpop.permute.xlu0 %553
  %555 = vrot.lane.b32.xlu0 %v302, 119
  %v556 = vpop.permute.xlu0 %555
  %557 = vrot.lane.b32.xlu0 %v303, 119
  %v558 = vpop.permute.xlu0 %557
  %vm559 = vcmask 973824
  %v560 = vsel %vm559, %v550, %v552
  %v561 = vsel %vm559, %v552, %v554
  %v562 = vsel %vm559, %v554, %v556
  %v563 = vsel %vm559, %v556, %v558
  %v569 = vadd.f32 %v544, %v560
  %v570 = vadd.f32 %v545, %v561
  %v571 = vadd.f32 %v546, %v562
  %v572 = vadd.f32 %v547, %v563
  %v573 = vadd.f32 %v548, %v558
  %579 = vrot.lane.b32.xlu0 %v294, 118
  %v580 = vpop.permute.xlu0 %579
  %581 = vrot.lane.b32.xlu0 %v295, 118
  %v582 = vpop.permute.xlu0 %581
  %583 = vrot.lane.b32.xlu0 %v296, 118
  %v584 = vpop.permute.xlu0 %583
  %585 = vrot.lane.b32.xlu0 %v297, 118
  %v586 = vpop.permute.xlu0 %585
  %587 = vrot.lane.b32.xlu0 %v298, 118
  %v588 = vpop.permute.xlu0 %587
  %vm589 = vcmask 965632
  %v590 = vsel %vm589, %v580, %v582
  %v591 = vsel %vm589, %v582, %v584
  %v592 = vsel %vm589, %v584, %v586
  %v593 = vsel %vm589, %v586, %v588
  %v599 = vadd.f32 %v569, %v590
  %v600 = vadd.f32 %v570, %v591
  %v601 = vadd.f32 %v571, %v592
  %v602 = vadd.f32 %v572, %v593
  %v603 = vadd.f32 %v573, %v588
  %v604 = vsel %vm589, %v603, 0.0
  %v605 = vmul.f32 %v599, %v599
  %v606 = vmul.f32 %v600, %v600
  %v607 = vmul.f32 %v599, %v600
  %v608 = vsub.f32 %v601, %v605
  %v609 = vsub.f32 %v602, %v606
  %v610 = vsub.f32 %v604, %v607
  %v611 = vmul.f32 %v610, 2.0
  %v612 = vadd.f32 %v611, 0.0036
  %v613 = vadd.f32 %v608, %v609
  %v614 = vadd.f32 %v613, 0.0036
  %v615 = vmul.f32 %v607, 2.0
  %v616 = vadd.f32 %v615, 0.0004
  %v617 = vmul.f32 %v616, %v612
  %v618 = vadd.f32 %v605, %v606
  %v619 = vadd.f32 %v618, 0.0004
  %v620 = vmul.f32 %v619, %v614
  %v621 = vrcp.pop %v620
  %v622 = vmul.f32 %v620, %v621
  %v623 = vsub.f32 1.0, %v622
  %v624 = vmul.f32 %v621, %v623
  %v625 = vadd.f32 %v621, %v624
  %vm626 = vweird.f32 %v620
  %vm627 = vweird.f32 %v621
  %vm628 = vmor %vm626, %vm627
  %v629 = vsel %vm628, %v621, %v625
  %v630 = vand.u32 2147483647, %v620
  %vm631 = vcmp.eq.f32.partialorder %v630, 8.507059e+37
  %v632 = vand.u32 %v620, 2147483648
  %v633 = vor.u32 1.1754944e-38, %v632
  %v634 = vsel %vm631, %v633, %v629
  %v635 = vmul.f32 %v617, %v634
  %v636 = vlaneseq
  %v637 = vand.u32 %v636, 127
  %vm638 = vcmp.lt.s32.totalorder %v637, 0
  %v639 = vsub.s32 0, %v637
  %v640 = vsel %vm638, %v639, %v637
  %v641 = vshrl.u32 %v640, 4
  %v642 = vand.u32 %v640, 15
  %v643 = vsub.s32 0, %v642
  %v644 = vsel %vm638, %v643, %v642
  %vm645 = vcmp.ne.s32.totalorder %v644, 0
  %vm646 = vcmp.lt.s32.totalorder %v644, 0
  %vm647 = vmand %vm646, %vm645
  %v648 = vadd.s32 %v644, 16
  %v649 = vsel %vm647, %v648, %v644
  %vm650 = vcmp.lt.s32.totalorder %v649, 6
  %v651 = vsel %vm650, %v635, 0.0
  %vm652 = vcmask 1045504
  %v653 = vsel %vm652, %v651, 0.0
  %v654 = vrot.slane %v653, 4
  %v655 = vadd.f32 %v653, %v654
  %v656 = vrot.slane %v655, 2
  %v657 = vadd.f32 %v655, %v656
  %v658 = vrot.slane %v657, 1
  %v659 = vadd.f32 %v657, %v658
  %v660 = vlaneseq
  %v661 = vshrl.u32 %v660, 7
  %vm662 = vcmp.eq.s32.totalorder %v661, 0
  %v663 = vsel %vm662, %v659, 0.0
  %664 = vst [vmem:[%s3] sm:$0xff] %v663
  // Predicated region
  $region14: #{_lambda_.1} parent=0 // pred_check
    _
  $region15: #{_lambda_.1} parent=0 // pred_check_branch
    %666 = sbr.rel (0) target = $region17
  $region16: #{_lambda_.1} parent=0 // pred_region
    _
  $region17: #{_lambda_.1} parent=0 // pred_fallthru
    _
  // Predicated region
  $region18: #{_lambda_.1} parent=0 // pred_check
    _
  $region19: #{_lambda_.1} parent=0 // pred_check_branch
    %668 = sbr.rel (0) target = $region21
  $region20: #{_lambda_.1} parent=0 // pred_region
    _
  $region21: #{_lambda_.1} parent=0 // pred_fallthru
    _

</llo_original>
